<compile_context>
chip_gen: v5e
topology: v5e:2x2
jax: 0.10.0
libtpu: 0.0.40
codegen_flags: <defaults>
</compile_context>

<pallas_src>
import jax
import jax.numpy as jnp
from jax.experimental import pallas as pl
from jax.experimental.pallas import tpu as pltpu

LANE = 128      # vreg lane width: hidden dim is lane-padded to a multiple of this
SUBLANE = 8     # vreg sublane width: batch-tile alignment


def _round_up(n: int, m: int) -> int:
    return ((n + m - 1) // m) * m


def _cdiv(a: int, b: int) -> int:
    return -(-a // b)


def omega_kernel(x_ref, w1_ref, b1_ref, w2_ref, b2_ref,
                 w3_ref, b3_ref, w4_ref, b4_ref, o_ref):
    """One batch tile: 4 fused MXU matmuls with fp32 bias/ReLU epilogues."""
    cdt = w1_ref.dtype  # MXU input dtype (bf16 in the fast path, fp32 otherwise)
    # Cast x in-kernel: cheaper than a separate wrapper-side pad/cast HBM pass.
    h = jnp.dot(x_ref[...].astype(cdt), w1_ref[...],
                preferred_element_type=jnp.float32)
    h = jnp.maximum(h + b1_ref[...], 0.0)                          # fp32 epilogue
    h = jnp.dot(h.astype(cdt), w2_ref[...], preferred_element_type=jnp.float32)
    h = jnp.maximum(h + b2_ref[...], 0.0)
    h = jnp.dot(h.astype(cdt), w3_ref[...], preferred_element_type=jnp.float32)
    h = jnp.maximum(h + b3_ref[...], 0.0)
    out = jnp.dot(h.astype(cdt), w4_ref[...], preferred_element_type=jnp.float32)
    o_ref[...] = (out + b4_ref[...]).astype(o_ref.dtype)


def preprocess_params(params, *, compute_dtype=jnp.bfloat16):
    """One-time weight/bias preparation (do NOT redo this per forward call).

    Only the hidden dim is zero-padded to a LANE multiple (exact for a
    Linear->ReLU stack: padded units have zero weight and zero bias).
    features_in / features_out stay at their true sizes. Weights are cast to the
    MXU input dtype; biases stay fp32 for the epilogue.
    """
    w1, b1, w2, b2, w3, b3, w4, b4 = params
    fin, hid = w1.shape
    fout = w4.shape[1]
    hid_p = _round_up(hid, LANE)
    # TODO(synk): on v7x at production widths (hid >= 4096) the bf16 w2/w3 blocks
    # are 32 MiB each and exceed the 64 MiB VMEM even single-buffered: add a
    # K-tiled "arbitrary" grid axis with an fp32 VMEM accumulator, and/or store
    # weights as fp8 (v7x MXU supports bf16+fp8) to halve weight bytes.
    pad2 = lambda a, r, c: jnp.pad(a, ((0, r - a.shape[0]), (0, c - a.shape[1])))
    return (
        pad2(w1, fin,   hid_p).astype(compute_dtype),
        pad2(b1, 1,     hid_p).astype(jnp.float32),
        pad2(w2, hid_p, hid_p).astype(compute_dtype),
        pad2(b2, 1,     hid_p).astype(jnp.float32),
        pad2(w3, hid_p, hid_p).astype(compute_dtype),
        pad2(b3, 1,     hid_p).astype(jnp.float32),
        pad2(w4, hid_p, fout).astype(compute_dtype),
        b4.astype(jnp.float32),
    )


def omega_mapper(x, prepped_params, *, tile_b=512):
    """Fused forward pass. `prepped_params` must come from preprocess_params()."""
    w1p, b1p, w2p, b2p, w3p, b3p, w4p, b4p = prepped_params
    B, fin = x.shape
    assert w1p.shape[0] == fin, "x feature dim does not match prepared weights"
    hid_p = w1p.shape[1]
    fout = w4p.shape[1]
    out_dtype = x.dtype   # TODO(synk): emit bf16 if the consumer tolerates it

    # Batch tile: multiple of SUBLANE, never (much) larger than the batch, and
    # clamped so there are >= 2 grid steps (keeps both v7x TCs / megacore busy).
    tile_b = max(SUBLANE, min(int(tile_b), _round_up(B, SUBLANE)))
    if B > SUBLANE:
        tile_b = min(tile_b, _round_up(_cdiv(B, 2), SUBLANE))
    tile_b = _round_up(tile_b, SUBLANE)
    n_tiles = _cdiv(B, tile_b)

    # Grid-invariant operands: constant index_map + single pipeline buffer
    # (no point double-buffering something that is never re-fetched).
    resident = lambda shape: pl.BlockSpec(shape, lambda i: (0, 0),
                                          pipeline_mode=pl.Buffered(1))

    # VMEM budget: resident weights/biases (x1), streamed x/out tiles (x2 each),
    # plus a few live fp32 intermediates; give the compiler 2x headroom, capped
    # at 64 MiB (v7x physical VMEM per TensorCore).
    nbytes = lambda a: a.size * a.dtype.itemsize
    weight_bytes = sum(nbytes(a) for a in prepped_params)
    stream_bytes = 2 * tile_b * (fin * x.dtype.itemsize
                                 + fout * jnp.dtype(out_dtype).itemsize)
    interm_bytes = 3 * tile_b * hid_p * 4
    vmem_limit = int(min(max(2 * (weight_bytes + stream_bytes + interm_bytes),
                             32 * 1024 * 1024), 64 * 1024 * 1024))

    flops = int(2 * n_tiles * tile_b
                * (fin * hid_p + 2 * hid_p * hid_p + hid_p * fout))
    bytes_accessed = int(nbytes(x) + weight_bytes
                         + B * fout * jnp.dtype(out_dtype).itemsize)

    return pl.pallas_call(
        omega_kernel,
        out_shape=jax.ShapeDtypeStruct((B, fout), out_dtype),
        grid_spec=pltpu.PrefetchScalarGridSpec(
            num_scalar_prefetch=0,
            grid=(n_tiles,),
            in_specs=[
                pl.BlockSpec((tile_b, fin), lambda i: (i, 0)),     # x tile (streamed)
                resident((fin, hid_p)),   resident((1, hid_p)),    # layer 1
                resident((hid_p, hid_p)), resident((1, hid_p)),    # layer 2
                resident((hid_p, hid_p)), resident((1, hid_p)),    # layer 3
                resident((hid_p, fout)),  resident((1, fout)),     # layer 4
            ],
            out_specs=pl.BlockSpec((tile_b, fout), lambda i: (i, 0)),
        ),
        compiler_params=pltpu.CompilerParams(
            dimension_semantics=("parallel",),           # megacore / v7x dual TC
            vmem_limit_bytes=vmem_limit,
        ),
        cost_estimate=pl.CostEstimate(
            flops=flops, transcendentals=0, bytes_accessed=bytes_accessed),
    )(x, w1p, b1p, w2p, b2p, w3p, b3p, w4p, b4p)


def init_params(key, features_in, features_out, hidden_dims):
    """Deterministic init mimicking nn.Linear default (uniform +/- 1/sqrt(fan_in)).
    Weights are stored transposed: (in_dim, out_dim); biases are (1, out_dim)."""
    dims = [(features_in, hidden_dims),
            (hidden_dims, hidden_dims),
            (hidden_dims, hidden_dims),
            (hidden_dims, features_out)]
    params = []
    for (din, dout) in dims:
        key, kw, kb = jax.random.split(key, 3)
        bound = 1.0 / jnp.sqrt(float(din))
        w = jax.random.uniform(kw, (din, dout), jnp.float32, -bound, bound)
        b = jax.random.uniform(kb, (1, dout), jnp.float32, -bound, bound)
        params += [w, b]
    return tuple(params)


def omega_reference(x, params):
    w1, b1, w2, b2, w3, b3, w4, b4 = params
    h = jnp.maximum(x @ w1 + b1, 0.0)
    h = jnp.maximum(h @ w2 + b2, 0.0)
    h = jnp.maximum(h @ w3 + b3, 0.0)
    return h @ w4 + b4


if __name__ == "__main__":
    features_in, features_out, hidden_dims = 32, 16, 64
    batch = 300   # not a multiple of the tile: exercises partial-block masking

    key = jax.random.PRNGKey(0)
    key, kx = jax.random.split(key)
    x = jax.random.normal(kx, (batch, features_in), jnp.float32)
    params = init_params(key, features_in, features_out, hidden_dims)

    ref = omega_reference(x, params)

    # fp32 path: tight check of the fused kernel + tiling/masking logic.
    p_f32 = preprocess_params(params, compute_dtype=jnp.float32)
    out_f32 = jax.block_until_ready(omega_mapper(x, p_f32, tile_b=512))
    assert out_f32.shape == (batch, features_out)
    assert jnp.allclose(out_f32, ref, atol=1e-5, rtol=1e-5), "fp32 mismatch vs reference"

    # bf16 MXU path (production config): bf16 MXU inputs, fp32 accumulation/epilogue.
    p_bf16 = preprocess_params(params, compute_dtype=jnp.bfloat16)
    out_bf16 = jax.block_until_ready(omega_mapper(x, p_bf16, tile_b=512))
    assert out_bf16.shape == (batch, features_out)
    assert jnp.allclose(out_bf16, ref, atol=5e-2, rtol=5e-2), "bf16 mismatch vs reference"

    print("KERNEL_OK")
</pallas_src>

<mosaic_0001>
module attributes {stable_mosaic.version = 11 : i64} {
  func.func @omega_kernel(%arg0: i32, %arg1: memref<152x32xf32, #tpu.memory_space<vmem>>, %arg2: memref<32x128xf32, #tpu.memory_space<vmem>>, %arg3: memref<1x128xf32, #tpu.memory_space<vmem>>, %arg4: memref<128x128xf32, #tpu.memory_space<vmem>>, %arg5: memref<1x128xf32, #tpu.memory_space<vmem>>, %arg6: memref<128x128xf32, #tpu.memory_space<vmem>>, %arg7: memref<1x128xf32, #tpu.memory_space<vmem>>, %arg8: memref<128x16xf32, #tpu.memory_space<vmem>>, %arg9: memref<1x16xf32, #tpu.memory_space<vmem>>, %arg10: memref<152x16xf32, #tpu.memory_space<vmem>>) attributes {dimension_semantics = [#tpu.dimension_semantics<parallel>], iteration_bounds = array<i64: 2>, scalar_prefetch = 0 : i64, scratch_operands = 0 : i64, tpu.core_type = #tpu.core_type<tc>, window_params = [{transform_indices = @transform_0, window_bounds = array<i64: 152, 32>}, {pipeline_mode = #tpu.pipeline_mode<synchronous>, transform_indices = @transform_1, window_bounds = array<i64: 32, 128>}, {pipeline_mode = #tpu.pipeline_mode<synchronous>, transform_indices = @transform_2, window_bounds = array<i64: 1, 128>}, {pipeline_mode = #tpu.pipeline_mode<synchronous>, transform_indices = @transform_3, window_bounds = array<i64: 128, 128>}, {pipeline_mode = #tpu.pipeline_mode<synchronous>, transform_indices = @transform_4, window_bounds = array<i64: 1, 128>}, {pipeline_mode = #tpu.pipeline_mode<synchronous>, transform_indices = @transform_5, window_bounds = array<i64: 128, 128>}, {pipeline_mode = #tpu.pipeline_mode<synchronous>, transform_indices = @transform_6, window_bounds = array<i64: 1, 128>}, {pipeline_mode = #tpu.pipeline_mode<synchronous>, transform_indices = @transform_7, window_bounds = array<i64: 128, 16>}, {pipeline_mode = #tpu.pipeline_mode<synchronous>, transform_indices = @transform_8, window_bounds = array<i64: 1, 16>}, {transform_indices = @transform_9, window_bounds = array<i64: 152, 16>}]} {
    %c0 = arith.constant 0 : index
    %c0_0 = arith.constant 0 : index
    %0 = vector.load %arg1[%c0, %c0_0] : memref<152x32xf32, #tpu.memory_space<vmem>>, vector<152x32xf32>
    %c0_1 = arith.constant 0 : index
    %c0_2 = arith.constant 0 : index
    %1 = vector.load %arg2[%c0_1, %c0_2] : memref<32x128xf32, #tpu.memory_space<vmem>>, vector<32x128xf32>
    %cst = arith.constant dense<0.000000e+00> : vector<152x128xf32>
    %2 = tpu.matmul %0, %1, %cst {dimension_numbers = #tpu.dot_dimension_numbers<[1], [0], [0], [1], [0, 0, 1, 1], [], []>} : vector<152x32xf32>, vector<32x128xf32>, vector<152x128xf32> -> vector<152x128xf32>
    %c0_3 = arith.constant 0 : index
    %c0_4 = arith.constant 0 : index
    %3 = vector.load %arg3[%c0_3, %c0_4] : memref<1x128xf32, #tpu.memory_space<vmem>>, vector<1x128xf32>
    %4 = vector.broadcast %3 : vector<1x128xf32> to vector<152x128xf32>
    %5 = arith.addf %2, %4 : vector<152x128xf32>
    %cst_5 = arith.constant 0.000000e+00 : f32
    %6 = vector.broadcast %cst_5 : f32 to vector<152x128xf32>
    %7 = arith.maximumf %5, %6 : vector<152x128xf32>
    %c0_6 = arith.constant 0 : index
    %c0_7 = arith.constant 0 : index
    %8 = vector.load %arg4[%c0_6, %c0_7] : memref<128x128xf32, #tpu.memory_space<vmem>>, vector<128x128xf32>
    %cst_8 = arith.constant dense<0.000000e+00> : vector<152x128xf32>
    %9 = tpu.matmul %7, %8, %cst_8 {dimension_numbers = #tpu.dot_dimension_numbers<[1], [0], [0], [1], [0, 0, 1, 1], [], []>} : vector<152x128xf32>, vector<128x128xf32>, vector<152x128xf32> -> vector<152x128xf32>
    %c0_9 = arith.constant 0 : index
    %c0_10 = arith.constant 0 : index
    %10 = vector.load %arg5[%c0_9, %c0_10] : memref<1x128xf32, #tpu.memory_space<vmem>>, vector<1x128xf32>
    %11 = vector.broadcast %10 : vector<1x128xf32> to vector<152x128xf32>
    %12 = arith.addf %9, %11 : vector<152x128xf32>
    %cst_11 = arith.constant 0.000000e+00 : f32
    %13 = vector.broadcast %cst_11 : f32 to vector<152x128xf32>
    %14 = arith.maximumf %12, %13 : vector<152x128xf32>
    %c0_12 = arith.constant 0 : index
    %c0_13 = arith.constant 0 : index
    %15 = vector.load %arg6[%c0_12, %c0_13] : memref<128x128xf32, #tpu.memory_space<vmem>>, vector<128x128xf32>
    %cst_14 = arith.constant dense<0.000000e+00> : vector<152x128xf32>
    %16 = tpu.matmul %14, %15, %cst_14 {dimension_numbers = #tpu.dot_dimension_numbers<[1], [0], [0], [1], [0, 0, 1, 1], [], []>} : vector<152x128xf32>, vector<128x128xf32>, vector<152x128xf32> -> vector<152x128xf32>
    %c0_15 = arith.constant 0 : index
    %c0_16 = arith.constant 0 : index
    %17 = vector.load %arg7[%c0_15, %c0_16] : memref<1x128xf32, #tpu.memory_space<vmem>>, vector<1x128xf32>
    %18 = vector.broadcast %17 : vector<1x128xf32> to vector<152x128xf32>
    %19 = arith.addf %16, %18 : vector<152x128xf32>
    %cst_17 = arith.constant 0.000000e+00 : f32
    %20 = vector.broadcast %cst_17 : f32 to vector<152x128xf32>
    %21 = arith.maximumf %19, %20 : vector<152x128xf32>
    %c0_18 = arith.constant 0 : index
    %c0_19 = arith.constant 0 : index
    %22 = vector.load %arg8[%c0_18, %c0_19] : memref<128x16xf32, #tpu.memory_space<vmem>>, vector<128x16xf32>
    %cst_20 = arith.constant dense<0.000000e+00> : vector<152x16xf32>
    %23 = tpu.matmul %21, %22, %cst_20 {dimension_numbers = #tpu.dot_dimension_numbers<[1], [0], [0], [1], [0, 0, 1, 1], [], []>} : vector<152x128xf32>, vector<128x16xf32>, vector<152x16xf32> -> vector<152x16xf32>
    %c0_21 = arith.constant 0 : index
    %c0_22 = arith.constant 0 : index
    %24 = vector.load %arg9[%c0_21, %c0_22] : memref<1x16xf32, #tpu.memory_space<vmem>>, vector<1x16xf32>
    %25 = vector.broadcast %24 : vector<1x16xf32> to vector<152x16xf32>
    %26 = arith.addf %23, %25 : vector<152x16xf32>
    %c0_23 = arith.constant 0 : index
    %c0_24 = arith.constant 0 : index
    %27 = vector.load %arg10[%c0_23, %c0_24] : memref<152x16xf32, #tpu.memory_space<vmem>>, vector<152x16xf32>
    tpu.vector_store %arg10[%c0_23, %c0_24], %26 {strides = array<i32>} : memref<152x16xf32, #tpu.memory_space<vmem>>, vector<152x16xf32>,
    return
  }
  func.func @transform_0(%arg0: i32) -> (i32, i32) {
    %c0_i32 = arith.constant 0 : i32
    %c0_i32_0 = arith.constant 0 : i32
    return %arg0, %c0_i32 : i32, i32
  }
  func.func @transform_1(%arg0: i32) -> (i32, i32) {
    %c0_i32 = arith.constant 0 : i32
    %c0_i32_0 = arith.constant 0 : i32
    %c0_i32_1 = arith.constant 0 : i32
    return %c0_i32, %c0_i32_0 : i32, i32
  }
  func.func @transform_2(%arg0: i32) -> (i32, i32) {
    %c0_i32 = arith.constant 0 : i32
    %c0_i32_0 = arith.constant 0 : i32
    %c0_i32_1 = arith.constant 0 : i32
    return %c0_i32, %c0_i32_0 : i32, i32
  }
  func.func @transform_3(%arg0: i32) -> (i32, i32) {
    %c0_i32 = arith.constant 0 : i32
    %c0_i32_0 = arith.constant 0 : i32
    %c0_i32_1 = arith.constant 0 : i32
    return %c0_i32, %c0_i32_0 : i32, i32
  }
  func.func @transform_4(%arg0: i32) -> (i32, i32) {
    %c0_i32 = arith.constant 0 : i32
    %c0_i32_0 = arith.constant 0 : i32
    %c0_i32_1 = arith.constant 0 : i32
    return %c0_i32, %c0_i32_0 : i32, i32
  }
  func.func @transform_5(%arg0: i32) -> (i32, i32) {
    %c0_i32 = arith.constant 0 : i32
    %c0_i32_0 = arith.constant 0 : i32
    %c0_i32_1 = arith.constant 0 : i32
    return %c0_i32, %c0_i32_0 : i32, i32
  }
  func.func @transform_6(%arg0: i32) -> (i32, i32) {
    %c0_i32 = arith.constant 0 : i32
    %c0_i32_0 = arith.constant 0 : i32
    %c0_i32_1 = arith.constant 0 : i32
    return %c0_i32, %c0_i32_0 : i32, i32
  }
  func.func @transform_7(%arg0: i32) -> (i32, i32) {
    %c0_i32 = arith.constant 0 : i32
    %c0_i32_0 = arith.constant 0 : i32
    %c0_i32_1 = arith.constant 0 : i32
    return %c0_i32, %c0_i32_0 : i32, i32
  }
  func.func @transform_8(%arg0: i32) -> (i32, i32) {
    %c0_i32 = arith.constant 0 : i32
    %c0_i32_0 = arith.constant 0 : i32
    %c0_i32_1 = arith.constant 0 : i32
    return %c0_i32, %c0_i32_0 : i32, i32
  }
  func.func @transform_9(%arg0: i32) -> (i32, i32) {
    %c0_i32 = arith.constant 0 : i32
    %c0_i32_0 = arith.constant 0 : i32
    return %arg0, %c0_i32 : i32, i32
  }
}

</mosaic_0001>

<llo_original>
// kernel: tpu_custom_call.1
$region0: #{tpu_custom_call.1}
  #allocation0 [shape = 'u32[]', space=smem, size = 0x4, offset = 0x4, fixed_abs, tag = 'smem constant byte address 0x4 - core index']
  #allocation1 [shape = 'u32[72,128]{1,0:T(1,128)}', space=vmem, size = 0x9000, scoped, tag = 'internal scratch']
  %s0 = inlined_call_operand.vmem [shape: f32[300,32], index: 0, kind: input, shape index: {}]
  %s1 = inlined_call_operand.vmem [shape: f32[32,128], index: 1, kind: input, shape index: {}]
  %s2 = inlined_call_operand.vmem [shape: f32[1,128], index: 2, kind: input, shape index: {}]
  %s3 = inlined_call_operand.vmem [shape: f32[128,128], index: 3, kind: input, shape index: {}]
  %s4 = inlined_call_operand.vmem [shape: f32[1,128], index: 4, kind: input, shape index: {}]
  %s5 = inlined_call_operand.vmem [shape: f32[128,128], index: 5, kind: input, shape index: {}]
  %s6 = inlined_call_operand.vmem [shape: f32[1,128], index: 6, kind: input, shape index: {}]
  %s7 = inlined_call_operand.vmem [shape: f32[128,16], index: 7, kind: input, shape index: {}]
  %s8 = inlined_call_operand.vmem [shape: f32[1,16], index: 8, kind: input, shape index: {}]
  %s9 = inlined_call_operand.vmem [shape: f32[300,16], index: 9, kind: output, shape index: {}]
  %s10 = sld [smem:[#allocation0]]
  $region69: #{tpu_custom_call.1} parent=0
    _
  %s12 = ssub.s32 1, %s10
  %s13 = scalar_select 0, %s12, %s10
  loop: start=0, step=1, limit=4
  $region2: #{tpu_custom_call.1} parent=0 // loop_pre_header
    _
  $region3: #{tpu_custom_call.1} parent=0 // loop_header
    %s15 = sphi 0, %s19
    %p16 = scmp.ge.s32.totalorder %s15, 4
    %s25 = sphi 0, %s27
    %s28 = sphi 0, %s25
    %s29 = sphi 0, %s28
    %s45 = sphi 0, %s29
    %s49 = sphi 0, %s49
    %s51 = sphi 0, %s49
    %s52 = sphi 0, %s51
    %s66 = sphi 0, %s52
    %s70 = sphi 0, %s70
    %s72 = sphi 0, %s70
    %s73 = sphi 0, %s72
    %s87 = sphi 0, %s73
    %s91 = sphi 0, %s91
    %s93 = sphi 0, %s91
    %s94 = sphi 0, %s93
    %s108 = sphi 0, %s94
    %s112 = sphi 0, %s112
    %s114 = sphi 0, %s112
    %s115 = sphi 0, %s114
    %s129 = sphi 0, %s115
    %s133 = sphi 0, %s133
    %s135 = sphi 0, %s133
    %s136 = sphi 0, %s135
    %s150 = sphi 0, %s136
    %s154 = sphi 0, %s154
    %s156 = sphi 0, %s154
    %s157 = sphi 0, %s156
    %s171 = sphi 0, %s157
    %s175 = sphi 0, %s175
    %s177 = sphi 0, %s175
    %s178 = sphi 0, %s177
    %s192 = sphi 0, %s178
    %s196 = sphi 0, %s196
    %s198 = sphi 0, %s196
    %s199 = sphi 0, %s198
    %s213 = sphi 0, %s199
    %s219 = sphi 0, %s221
    %s222 = sphi 0, %s219
    %s223 = sphi 0, %s222
    %s239 = sphi 0, %s223
  $region4: #{tpu_custom_call.1} parent=0 // loop_header_branch
    %18 = sbr.rel (%p16) target = $region8
  $region5: #{tpu_custom_call.1} parent=0 // loop_body
    %s20 = ssub.s32 %s15, 1
    %s21 = ssub.s32 %s15, 2
    %s22 = sadd.s32 %s15, 1
    %s23 = ssub.s32 %s15, %s22
    %p24 = scmp.eq.s32.totalorder %s23, 0
    %s26 = sadd.s32 %s25, 1
    %s27 = scalar_select %p24, %s25, %s26
    %p30 = pneg %p24
    %p31 = scmp.eq.s32.totalorder %s15, 1
    %p32 = por %p30, %p31
    %p33 = scmp.ne.s32.totalorder %s25, %s28
    %p34 = scmp.eq.s32.totalorder %s15, 0
    %p35 = por %p33, %p34
    %p36 = scmp.ne.s32.totalorder %s25, %s28
    %p37 = scmp.eq.s32.totalorder %s20, 1
    %p38 = por %p36, %p37
    %p39 = scmp.ne.s32.totalorder %s28, %s29
    %p40 = scmp.eq.s32.totalorder %s20, 0
    %p41 = por %p39, %p40
    %p42 = scmp.ne.s32.totalorder %s28, %s29
    %p43 = scmp.eq.s32.totalorder %s21, 1
    %p44 = por %p42, %p43
    %p46 = scmp.ne.s32.totalorder %s29, %s45
    %p47 = scmp.eq.s32.totalorder %s21, 0
    %p48 = por %p46, %p47
    %s50 = sadd.s32 %s49, 1
    %p53 = scmp.eq.s32.totalorder %s15, 1
    %p54 = scmp.ne.s32.totalorder %s49, %s51
    %p55 = scmp.eq.s32.totalorder %s15, 0
    %p56 = por %p54, %p55
    %p57 = scmp.ne.s32.totalorder %s49, %s51
    %p58 = scmp.eq.s32.totalorder %s20, 1
    %p59 = por %p57, %p58
    %p60 = scmp.ne.s32.totalorder %s51, %s52
    %p61 = scmp.eq.s32.totalorder %s20, 0
    %p62 = por %p60, %p61
    %p63 = scmp.ne.s32.totalorder %s51, %s52
    %p64 = scmp.eq.s32.totalorder %s21, 1
    %p65 = por %p63, %p64
    %p67 = scmp.ne.s32.totalorder %s52, %s66
    %p68 = scmp.eq.s32.totalorder %s21, 0
    %p69 = por %p67, %p68
    %s71 = sadd.s32 %s70, 1
    %p74 = scmp.eq.s32.totalorder %s15, 1
    %p75 = scmp.ne.s32.totalorder %s70, %s72
    %p76 = scmp.eq.s32.totalorder %s15, 0
    %p77 = por %p75, %p76
    %p78 = scmp.ne.s32.totalorder %s70, %s72
    %p79 = scmp.eq.s32.totalorder %s20, 1
    %p80 = por %p78, %p79
    %p81 = scmp.ne.s32.totalorder %s72, %s73
    %p82 = scmp.eq.s32.totalorder %s20, 0
    %p83 = por %p81, %p82
    %p84 = scmp.ne.s32.totalorder %s72, %s73
    %p85 = scmp.eq.s32.totalorder %s21, 1
    %p86 = por %p84, %p85
    %p88 = scmp.ne.s32.totalorder %s73, %s87
    %p89 = scmp.eq.s32.totalorder %s21, 0
    %p90 = por %p88, %p89
    %s92 = sadd.s32 %s91, 1
    %p95 = scmp.eq.s32.totalorder %s15, 1
    %p96 = scmp.ne.s32.totalorder %s91, %s93
    %p97 = scmp.eq.s32.totalorder %s15, 0
    %p98 = por %p96, %p97
    %p99 = scmp.ne.s32.totalorder %s91, %s93
    %p100 = scmp.eq.s32.totalorder %s20, 1
    %p101 = por %p99, %p100
    %p102 = scmp.ne.s32.totalorder %s93, %s94
    %p103 = scmp.eq.s32.totalorder %s20, 0
    %p104 = por %p102, %p103
    %p105 = scmp.ne.s32.totalorder %s93, %s94
    %p106 = scmp.eq.s32.totalorder %s21, 1
    %p107 = por %p105, %p106
    %p109 = scmp.ne.s32.totalorder %s94, %s108
    %p110 = scmp.eq.s32.totalorder %s21, 0
    %p111 = por %p109, %p110
    %s113 = sadd.s32 %s112, 1
    %p116 = scmp.eq.s32.totalorder %s15, 1
    %p117 = scmp.ne.s32.totalorder %s112, %s114
    %p118 = scmp.eq.s32.totalorder %s15, 0
    %p119 = por %p117, %p118
    %p120 = scmp.ne.s32.totalorder %s112, %s114
    %p121 = scmp.eq.s32.totalorder %s20, 1
    %p122 = por %p120, %p121
    %p123 = scmp.ne.s32.totalorder %s114, %s115
    %p124 = scmp.eq.s32.totalorder %s20, 0
    %p125 = por %p123, %p124
    %p126 = scmp.ne.s32.totalorder %s114, %s115
    %p127 = scmp.eq.s32.totalorder %s21, 1
    %p128 = por %p126, %p127
    %p130 = scmp.ne.s32.totalorder %s115, %s129
    %p131 = scmp.eq.s32.totalorder %s21, 0
    %p132 = por %p130, %p131
    %s134 = sadd.s32 %s133, 1
    %p137 = scmp.eq.s32.totalorder %s15, 1
    %p138 = scmp.ne.s32.totalorder %s133, %s135
    %p139 = scmp.eq.s32.totalorder %s15, 0
    %p140 = por %p138, %p139
    %p141 = scmp.ne.s32.totalorder %s133, %s135
    %p142 = scmp.eq.s32.totalorder %s20, 1
    %p143 = por %p141, %p142
    %p144 = scmp.ne.s32.totalorder %s135, %s136
    %p145 = scmp.eq.s32.totalorder %s20, 0
    %p146 = por %p144, %p145
    %p147 = scmp.ne.s32.totalorder %s135, %s136
    %p148 = scmp.eq.s32.totalorder %s21, 1
    %p149 = por %p147, %p148
    %p151 = scmp.ne.s32.totalorder %s136, %s150
    %p152 = scmp.eq.s32.totalorder %s21, 0
    %p153 = por %p151, %p152
    %s155 = sadd.s32 %s154, 1
    %p158 = scmp.eq.s32.totalorder %s15, 1
    %p159 = scmp.ne.s32.totalorder %s154, %s156
    %p160 = scmp.eq.s32.totalorder %s15, 0
    %p161 = por %p159, %p160
    %p162 = scmp.ne.s32.totalorder %s154, %s156
    %p163 = scmp.eq.s32.totalorder %s20, 1
    %p164 = por %p162, %p163
    %p165 = scmp.ne.s32.totalorder %s156, %s157
    %p166 = scmp.eq.s32.totalorder %s20, 0
    %p167 = por %p165, %p166
    %p168 = scmp.ne.s32.totalorder %s156, %s157
    %p169 = scmp.eq.s32.totalorder %s21, 1
    %p170 = por %p168, %p169
    %p172 = scmp.ne.s32.totalorder %s157, %s171
    %p173 = scmp.eq.s32.totalorder %s21, 0
    %p174 = por %p172, %p173
    %s176 = sadd.s32 %s175, 1
    %p179 = scmp.eq.s32.totalorder %s15, 1
    %p180 = scmp.ne.s32.totalorder %s175, %s177
    %p181 = scmp.eq.s32.totalorder %s15, 0
    %p182 = por %p180, %p181
    %p183 = scmp.ne.s32.totalorder %s175, %s177
    %p184 = scmp.eq.s32.totalorder %s20, 1
    %p185 = por %p183, %p184
    %p186 = scmp.ne.s32.totalorder %s177, %s178
    %p187 = scmp.eq.s32.totalorder %s20, 0
    %p188 = por %p186, %p187
    %p189 = scmp.ne.s32.totalorder %s177, %s178
    %p190 = scmp.eq.s32.totalorder %s21, 1
    %p191 = por %p189, %p190
    %p193 = scmp.ne.s32.totalorder %s178, %s192
    %p194 = scmp.eq.s32.totalorder %s21, 0
    %p195 = por %p193, %p194
    %s197 = sadd.s32 %s196, 1
    %p200 = scmp.eq.s32.totalorder %s15, 1
    %p201 = scmp.ne.s32.totalorder %s196, %s198
    %p202 = scmp.eq.s32.totalorder %s15, 0
    %p203 = por %p201, %p202
    %p204 = scmp.ne.s32.totalorder %s196, %s198
    %p205 = scmp.eq.s32.totalorder %s20, 1
    %p206 = por %p204, %p205
    %p207 = scmp.ne.s32.totalorder %s198, %s199
    %p208 = scmp.eq.s32.totalorder %s20, 0
    %p209 = por %p207, %p208
    %p210 = scmp.ne.s32.totalorder %s198, %s199
    %p211 = scmp.eq.s32.totalorder %s21, 1
    %p212 = por %p210, %p211
    %p214 = scmp.ne.s32.totalorder %s199, %s213
    %p215 = scmp.eq.s32.totalorder %s21, 0
    %p216 = por %p214, %p215
    %s217 = ssub.s32 %s15, %s22
    %p218 = scmp.eq.s32.totalorder %s217, 0
    %s220 = sadd.s32 %s219, 1
    %s221 = scalar_select %p218, %s219, %s220
    %p224 = pneg %p218
    %p225 = scmp.eq.s32.totalorder %s15, 1
    %p226 = por %p224, %p225
    %p227 = scmp.ne.s32.totalorder %s219, %s222
    %p228 = scmp.eq.s32.totalorder %s15, 0
    %p229 = por %p227, %p228
    %p230 = scmp.ne.s32.totalorder %s219, %s222
    %p231 = scmp.eq.s32.totalorder %s20, 1
    %p232 = por %p230, %p231
    %p233 = scmp.ne.s32.totalorder %s222, %s223
    %p234 = scmp.eq.s32.totalorder %s20, 0
    %p235 = por %p233, %p234
    %p236 = scmp.ne.s32.totalorder %s222, %s223
    %p237 = scmp.eq.s32.totalorder %s21, 1
    %p238 = por %p236, %p237
    %p240 = scmp.ne.s32.totalorder %s223, %s239
    %p241 = scmp.eq.s32.totalorder %s21, 0
    %p242 = por %p240, %p241
    %p243 = scmp.le.s32.totalorder 1, %s15
    %p244 = scmp.lt.s32.totalorder %s15, 3
    %p245 = pnand %p243, %p244
    %p246 = pneg %p245
    // Predicated region
    $region9: #{tpu_custom_call.1} parent=5 // pred_check
      _
    $region10: #{tpu_custom_call.1} parent=5 // pred_check_branch
      %248 = sbr.rel (%p245) target = $region12
    $region11: #{tpu_custom_call.1} parent=5 // pred_region
      %s249 = ssub.s32 %s15, 1
      // Predicated region
      $region13: #{tpu_custom_call.1} parent=11 // pred_check
        %p250 = pneg %p62
      $region14: #{tpu_custom_call.1} parent=11 // pred_check_branch
        %252 = sbr.rel (%p250) target = $region16
      $region15: #{tpu_custom_call.1} parent=11 // pred_region
        _
      $region16: #{tpu_custom_call.1} parent=11 // pred_fallthru
        _
      // Predicated region
      $region17: #{tpu_custom_call.1} parent=11 // pred_check
        %p253 = pneg %p83
      $region18: #{tpu_custom_call.1} parent=11 // pred_check_branch
        %255 = sbr.rel (%p253) target = $region20
      $region19: #{tpu_custom_call.1} parent=11 // pred_region
        _
      $region20: #{tpu_custom_call.1} parent=11 // pred_fallthru
        _
      // Predicated region
      $region21: #{tpu_custom_call.1} parent=11 // pred_check
        %p256 = pneg %p104
      $region22: #{tpu_custom_call.1} parent=11 // pred_check_branch
        %258 = sbr.rel (%p256) target = $region24
      $region23: #{tpu_custom_call.1} parent=11 // pred_region
        _
      $region24: #{tpu_custom_call.1} parent=11 // pred_fallthru
        _
      // Predicated region
      $region25: #{tpu_custom_call.1} parent=11 // pred_check
        %p259 = pneg %p125
      $region26: #{tpu_custom_call.1} parent=11 // pred_check_branch
        %261 = sbr.rel (%p259) target = $region28
      $region27: #{tpu_custom_call.1} parent=11 // pred_region
        _
      $region28: #{tpu_custom_call.1} parent=11 // pred_fallthru
        _
      // Predicated region
      $region29: #{tpu_custom_call.1} parent=11 // pred_check
        %p262 = pneg %p146
      $region30: #{tpu_custom_call.1} parent=11 // pred_check_branch
        %264 = sbr.rel (%p262) target = $region32
      $region31: #{tpu_custom_call.1} parent=11 // pred_region
        _
      $region32: #{tpu_custom_call.1} parent=11 // pred_fallthru
        _
      // Predicated region
      $region33: #{tpu_custom_call.1} parent=11 // pred_check
        %p265 = pneg %p167
      $region34: #{tpu_custom_call.1} parent=11 // pred_check_branch
        %267 = sbr.rel (%p265) target = $region36
      $region35: #{tpu_custom_call.1} parent=11 // pred_region
        _
      $region36: #{tpu_custom_call.1} parent=11 // pred_fallthru
        _
      // Predicated region
      $region37: #{tpu_custom_call.1} parent=11 // pred_check
        %p268 = pneg %p188
      $region38: #{tpu_custom_call.1} parent=11 // pred_check_branch
        %270 = sbr.rel (%p268) target = $region40
      $region39: #{tpu_custom_call.1} parent=11 // pred_region
        _
      $region40: #{tpu_custom_call.1} parent=11 // pred_fallthru
        _
      // Predicated region
      $region41: #{tpu_custom_call.1} parent=11 // pred_check
        %p271 = pneg %p209
      $region42: #{tpu_custom_call.1} parent=11 // pred_check_branch
        %273 = sbr.rel (%p271) target = $region44
      $region43: #{tpu_custom_call.1} parent=11 // pred_region
        _
      $region44: #{tpu_custom_call.1} parent=11 // pred_fallthru
        _
    $region12: #{tpu_custom_call.1} parent=5 // pred_fallthru
      _
    %p274 = scmp.lt.s32.totalorder %s15, 2
    // Predicated region
    $region45: #{tpu_custom_call.1} parent=5 // pred_check
      %p275 = pneg %p274
    $region46: #{tpu_custom_call.1} parent=5 // pred_check_branch
      %277 = sbr.rel (%p275) target = $region48
    $region47: #{tpu_custom_call.1} parent=5 // pred_region
      // Predicated region
      $region49: #{tpu_custom_call.1} parent=47 // pred_check
        %p278 = pneg %p35
      $region50: #{tpu_custom_call.1} parent=47 // pred_check_branch
        %280 = sbr.rel (%p278) target = $region52
      $region51: #{tpu_custom_call.1} parent=47 // pred_region
        %s281 = smul.u32 19, %s15
        %p282 = scmp.lt.s32.totalorder %s281, 37
        %s283 = scalar_select %p282, %s281, 37
        %s284 = smul.addr %s283, 8
        %s285 = scalar_lea.vmem %s0, %s284
        %s286 = smul.u32 19, %s15
      $region52: #{tpu_custom_call.1} parent=47 // pred_fallthru
        _
    $region48: #{tpu_custom_call.1} parent=5 // pred_fallthru
      _
    %p287 = scmp.le.s32.totalorder 1, %s15
    %p288 = scmp.lt.s32.totalorder %s15, 3
    %p289 = pnand %p287, %p288
    %p290 = pneg %p289
    // Predicated region
    $region53: #{tpu_custom_call.1} parent=5 // pred_check
      _
    $region54: #{tpu_custom_call.1} parent=5 // pred_check_branch
      %292 = sbr.rel (%p289) target = $region56
    $region55: #{tpu_custom_call.1} parent=5 // pred_region
      %s293 = ssub.s32 %s15, 1
      %s294 = smul.u32 19, %s20
      %p295 = scmp.lt.s32.totalorder %s294, 37
      %s296 = scalar_select %p295, %s294, 37
      %s297 = smul.addr %s296, 8
      %s298 = scalar_lea.vmem %s0, %s297
      %p299 = pneg %p41
      %p300 = pneg %p38
      %p301 = pneg %p62
      %p302 = pneg %p59
      %p303 = pneg %p83
      %p304 = pneg %p80
      %p305 = pneg %p104
      %p306 = pneg %p101
      %p307 = pneg %p125
      %p308 = pneg %p122
      %p309 = pneg %p146
      %p310 = pneg %p143
      %p311 = pneg %p167
      %p312 = pneg %p164
      %p313 = pneg %p188
      %p314 = pneg %p185
      %p315 = pneg %p209
      %p316 = pneg %p206
      %p317 = pneg %p235
      %p318 = pneg %p232
      %s319 = smul.u32 19, %s20
      %p320 = scmp.lt.s32.totalorder %s319, 37
      %s321 = scalar_select %p320, %s319, 37
      %s322 = smul.addr %s321, 8
      %s323 = scalar_lea.vmem %s9, %s322
      %s324 = smul.u32 19, %s20
      %p325 = scmp.lt.s32.totalorder %s324, 37
      %s326 = scalar_select %p325, %s324, 37
      %s327 = smul.addr %s326, 8
      %s328 = scalar_lea.vmem %s0, %s327
      %s329 = smul.u32 19, %s20
      %s330 = smul.u32 19, %s20
      %p331 = scmp.lt.s32.totalorder %s330, 37
      %s332 = scalar_select %p331, %s330, 37
      %s333 = smul.addr %s332, 8
      %s334 = scalar_lea.vmem %s9, %s333
      %s335 = smul.u32 19, %s20
      %v336 = vld [vmem:[%s328] sm:$0xff]
      %v337 = vld [vmem:[%s328 + $0x8] sm:$0xff]
      %v338 = vld [vmem:[%s328 + $0x10] sm:$0xff]
      %v339 = vld [vmem:[%s328 + $0x18] sm:$0xff]
      %v340 = vld [vmem:[%s328 + $0x20] sm:$0xff]
      %v341 = vld [vmem:[%s328 + $0x28] sm:$0xff]
      %v342 = vld [vmem:[%s328 + $0x30] sm:$0xff]
      %v343 = vld [vmem:[%s328 + $0x38] sm:$0xff]
      %v344 = vld [vmem:[%s328 + $0x40] sm:$0xff]
      %v345 = vld [vmem:[%s328 + $0x48] sm:$0xff]
      %v346 = vld [vmem:[%s328 + $0x50] sm:$0xff]
      %v347 = vld [vmem:[%s328 + $0x58] sm:$0xff]
      %v348 = vld [vmem:[%s328 + $0x60] sm:$0xff]
      %v349 = vld [vmem:[%s328 + $0x68] sm:$0xff]
      %v350 = vld [vmem:[%s328 + $0x70] sm:$0xff]
      %v351 = vld [vmem:[%s328 + $0x78] sm:$0xff]
      %v352 = vld [vmem:[%s328 + $0x80] sm:$0xff]
      %v353 = vld [vmem:[%s328 + $0x88] sm:$0xff]
      %v354 = vld [vmem:[%s328 + $0x90] sm:$0xff]
      %v355 = vld [vmem:[%s1] sm:$0xff]
      %v356 = vld [vmem:[%s1 + $0x8] sm:$0xff]
      %v357 = vld [vmem:[%s1 + $0x10] sm:$0xff]
      %v358 = vld [vmem:[%s1 + $0x18] sm:$0xff]
      %v359 = vld [vmem:[%s2] sm:$0x1]
      %v361 = vperm.slane %v359, 0
      %vm363 = vcmask 261120
      %v365 = vsel %vm363, %v336, 0
      %v368 = vsel %vm363, %v337, 0
      %v371 = vsel %vm363, %v338, 0
      %v374 = vsel %vm363, %v339, 0
      %v377 = vsel %vm363, %v340, 0
      %v380 = vsel %vm363, %v341, 0
      %v383 = vsel %vm363, %v342, 0
      %v386 = vsel %vm363, %v343, 0
      %v389 = vsel %vm363, %v344, 0
      %v392 = vsel %vm363, %v345, 0
      %v395 = vsel %vm363, %v346, 0
      %v398 = vsel %vm363, %v347, 0
      %v401 = vsel %vm363, %v348, 0
      %v404 = vsel %vm363, %v349, 0
      %v407 = vsel %vm363, %v350, 0
      %v410 = vsel %vm363, %v351, 0
      %v413 = vsel %vm363, %v352, 0
      %v416 = vsel %vm363, %v353, 0
      %v419 = vsel %vm363, %v354, 0
      %421 = vmatpush.msra.mxu0 0.0
      %422 = vmatpush.msra.mxu0 0.0
      %423 = vmatpush.msra.mxu0 0.0
      %424 = vmatpush.msra.mxu0 0.0
      %425 = vmatpush.msra.mxu0 0.0
      %426 = vmatpush.msra.mxu0 0.0
      %427 = vmatpush.msra.mxu0 0.0
      %428 = vmatpush.msra.mxu0 0.0
      %429 = vmatpush.msra.mxu0 0.0
      %430 = vmatpush.msra.mxu0 0.0
      %431 = vmatpush.msra.mxu0 0.0
      %432 = vmatpush.msra.mxu0 0.0
      %433 = vmatpush.msra.mxu0 %v358
      %434 = vmatpush.msra.mxu0 %v357
      %435 = vmatpush.msra.mxu0 %v356
      %436 = vmatpush.msra.mxu0 %v355
      %437 = vmatmul.f32.gmra.mxu0 %v365
      %v438 = vpop.f32.mrf.mxu0
      %v439 = vadd.f32 %v361, %v438
      %440 = vmatmul.f32.gmra.mxu0 %v368
      %v441 = vpop.f32.mrf.mxu0
      %v442 = vadd.f32 %v361, %v441
      %443 = vmatmul.f32.gmra.mxu0 %v371
      %v444 = vpop.f32.mrf.mxu0
      %v445 = vadd.f32 %v361, %v444
      %446 = vmatmul.f32.gmra.mxu0 %v374
      %v447 = vpop.f32.mrf.mxu0
      %v448 = vadd.f32 %v361, %v447
      %449 = vmatmul.f32.gmra.mxu0 %v377
      %v450 = vpop.f32.mrf.mxu0
      %v451 = vadd.f32 %v361, %v450
      %452 = vmatmul.f32.gmra.mxu0 %v380
      %v453 = vpop.f32.mrf.mxu0
      %v454 = vadd.f32 %v361, %v453
      %455 = vmatmul.f32.gmra.mxu0 %v383
      %v456 = vpop.f32.mrf.mxu0
      %v457 = vadd.f32 %v361, %v456
      %458 = vmatmul.f32.gmra.mxu0 %v386
      %v459 = vpop.f32.mrf.mxu0
      %v460 = vadd.f32 %v361, %v459
      %461 = vmatmul.f32.gmra.mxu0 %v389
      %v462 = vpop.f32.mrf.mxu0
      %v463 = vadd.f32 %v361, %v462
      %464 = vmatmul.f32.gmra.mxu0 %v392
      %v465 = vpop.f32.mrf.mxu0
      %v466 = vadd.f32 %v361, %v465
      %467 = vmatmul.f32.gmra.mxu0 %v395
      %v468 = vpop.f32.mrf.mxu0
      %v469 = vadd.f32 %v361, %v468
      %470 = vmatmul.f32.gmra.mxu0 %v398
      %v471 = vpop.f32.mrf.mxu0
      %v472 = vadd.f32 %v361, %v471
      %473 = vmatmul.f32.gmra.mxu0 %v401
      %v474 = vpop.f32.mrf.mxu0
      %v475 = vadd.f32 %v361, %v474
      %476 = vmatmul.f32.gmra.mxu0 %v404
      %v477 = vpop.f32.mrf.mxu0
      %v478 = vadd.f32 %v361, %v477
      %479 = vmatmul.f32.gmra.mxu0 %v407
      %v480 = vpop.f32.mrf.mxu0
      %v481 = vadd.f32 %v361, %v480
      %482 = vmatmul.f32.gmra.mxu0 %v410
      %v483 = vpop.f32.mrf.mxu0
      %v484 = vadd.f32 %v361, %v483
      %485 = vmatmul.f32.gmra.mxu0 %v413
      %v486 = vpop.f32.mrf.mxu0
      %v487 = vadd.f32 %v361, %v486
      %488 = vmatmul.f32.gmra.mxu0 %v416
      %v489 = vpop.f32.mrf.mxu0
      %v490 = vadd.f32 %v361, %v489
      %491 = vmatmul.f32.gmra.mxu0 %v419
      %v492 = vpop.f32.mrf.mxu0
      %v493 = vadd.f32 %v361, %v492
      %494 = vdwg.mxu0
      %v495 = vmax.f32 %v439, 0.0
      %v496 = vmax.f32 %v442, 0.0
      %v497 = vmax.f32 %v445, 0.0
      %v498 = vmax.f32 %v448, 0.0
      %v499 = vmax.f32 %v451, 0.0
      %v500 = vmax.f32 %v454, 0.0
      %v501 = vmax.f32 %v457, 0.0
      %v502 = vmax.f32 %v460, 0.0
      %v503 = vmax.f32 %v463, 0.0
      %v504 = vmax.f32 %v466, 0.0
      %v505 = vmax.f32 %v469, 0.0
      %v506 = vmax.f32 %v472, 0.0
      %v507 = vmax.f32 %v475, 0.0
      %v508 = vmax.f32 %v478, 0.0
      %v509 = vmax.f32 %v481, 0.0
      %v510 = vmax.f32 %v484, 0.0
      %v511 = vmax.f32 %v487, 0.0
      %v512 = vmax.f32 %v490, 0.0
      %v513 = vmax.f32 %v493, 0.0
      %v514 = vld [vmem:[%s3] sm:$0xff]
      %v515 = vld [vmem:[%s3 + $0x8] sm:$0xff]
      %v516 = vld [vmem:[%s3 + $0x10] sm:$0xff]
      %v517 = vld [vmem:[%s3 + $0x18] sm:$0xff]
      %v518 = vld [vmem:[%s3 + $0x20] sm:$0xff]
      %v519 = vld [vmem:[%s3 + $0x28] sm:$0xff]
      %v520 = vld [vmem:[%s3 + $0x30] sm:$0xff]
      %v521 = vld [vmem:[%s3 + $0x38] sm:$0xff]
      %v522 = vld [vmem:[%s3 + $0x40] sm:$0xff]
      %v523 = vld [vmem:[%s3 + $0x48] sm:$0xff]
      %v524 = vld [vmem:[%s3 + $0x50] sm:$0xff]
      %v525 = vld [vmem:[%s3 + $0x58] sm:$0xff]
      %v526 = vld [vmem:[%s3 + $0x60] sm:$0xff]
      %v527 = vld [vmem:[%s3 + $0x68] sm:$0xff]
      %v528 = vld [vmem:[%s3 + $0x70] sm:$0xff]
      %v529 = vld [vmem:[%s3 + $0x78] sm:$0xff]
      %v530 = vld [vmem:[%s4] sm:$0x1]
      %v532 = vperm.slane %v530, 0
      %534 = vmatpush.msra.mxu0 %v529
      %535 = vmatpush.msra.mxu0 %v528
      %536 = vmatpush.msra.mxu0 %v527
      %537 = vmatpush.msra.mxu0 %v526
      %538 = vmatpush.msra.mxu0 %v525
      %539 = vmatpush.msra.mxu0 %v524
      %540 = vmatpush.msra.mxu0 %v523
      %541 = vmatpush.msra.mxu0 %v522
      %542 = vmatpush.msra.mxu0 %v521
      %543 = vmatpush.msra.mxu0 %v520
      %544 = vmatpush.msra.mxu0 %v519
      %545 = vmatpush.msra.mxu0 %v518
      %546 = vmatpush.msra.mxu0 %v517
      %547 = vmatpush.msra.mxu0 %v516
      %548 = vmatpush.msra.mxu0 %v515
      %549 = vmatpush.msra.mxu0 %v514
      %550 = vmatmul.f32.gmra.mxu0 %v495
      %v551 = vpop.f32.mrf.mxu0
      %v552 = vadd.f32 %v532, %v551
      %553 = vmatmul.f32.gmra.mxu0 %v496
      %v554 = vpop.f32.mrf.mxu0
      %v555 = vadd.f32 %v532, %v554
      %556 = vmatmul.f32.gmra.mxu0 %v497
      %v557 = vpop.f32.mrf.mxu0
      %v558 = vadd.f32 %v532, %v557
      %559 = vmatmul.f32.gmra.mxu0 %v498
      %v560 = vpop.f32.mrf.mxu0
      %v561 = vadd.f32 %v532, %v560
      %562 = vmatmul.f32.gmra.mxu0 %v499
      %v563 = vpop.f32.mrf.mxu0
      %v564 = vadd.f32 %v532, %v563
      %565 = vmatmul.f32.gmra.mxu0 %v500
      %v566 = vpop.f32.mrf.mxu0
      %v567 = vadd.f32 %v532, %v566
      %568 = vmatmul.f32.gmra.mxu0 %v501
      %v569 = vpop.f32.mrf.mxu0
      %v570 = vadd.f32 %v532, %v569
      %571 = vmatmul.f32.gmra.mxu0 %v502
      %v572 = vpop.f32.mrf.mxu0
      %v573 = vadd.f32 %v532, %v572
      %574 = vmatmul.f32.gmra.mxu0 %v503
      %v575 = vpop.f32.mrf.mxu0
      %v576 = vadd.f32 %v532, %v575
      %577 = vmatmul.f32.gmra.mxu0 %v504
      %v578 = vpop.f32.mrf.mxu0
      %v579 = vadd.f32 %v532, %v578
      %580 = vmatmul.f32.gmra.mxu0 %v505
      %v581 = vpop.f32.mrf.mxu0
      %v582 = vadd.f32 %v532, %v581
      %583 = vmatmul.f32.gmra.mxu0 %v506
      %v584 = vpop.f32.mrf.mxu0
      %v585 = vadd.f32 %v532, %v584
      %586 = vmatmul.f32.gmra.mxu0 %v507
      %v587 = vpop.f32.mrf.mxu0
      %v588 = vadd.f32 %v532, %v587
      %589 = vmatmul.f32.gmra.mxu0 %v508
      %v590 = vpop.f32.mrf.mxu0
      %v591 = vadd.f32 %v532, %v590
      %592 = vmatmul.f32.gmra.mxu0 %v509
      %v593 = vpop.f32.mrf.mxu0
      %v594 = vadd.f32 %v532, %v593
      %595 = vmatmul.f32.gmra.mxu0 %v510
      %v596 = vpop.f32.mrf.mxu0
      %v597 = vadd.f32 %v532, %v596
      %598 = vmatmul.f32.gmra.mxu0 %v511
      %v599 = vpop.f32.mrf.mxu0
      %v600 = vadd.f32 %v532, %v599
      %601 = vmatmul.f32.gmra.mxu0 %v512
      %v602 = vpop.f32.mrf.mxu0
      %v603 = vadd.f32 %v532, %v602
      %604 = vmatmul.f32.gmra.mxu0 %v513
      %v605 = vpop.f32.mrf.mxu0
      %v606 = vadd.f32 %v532, %v605
      %607 = vdwg.mxu0
      %v608 = vmax.f32 %v552, 0.0
      %v609 = vmax.f32 %v555, 0.0
      %v610 = vmax.f32 %v558, 0.0
      %v611 = vmax.f32 %v561, 0.0
      %v612 = vmax.f32 %v564, 0.0
      %v613 = vmax.f32 %v567, 0.0
      %v614 = vmax.f32 %v570, 0.0
      %v615 = vmax.f32 %v573, 0.0
      %v616 = vmax.f32 %v576, 0.0
      %v617 = vmax.f32 %v579, 0.0
      %v618 = vmax.f32 %v582, 0.0
      %v619 = vmax.f32 %v585, 0.0
      %v620 = vmax.f32 %v588, 0.0
      %v621 = vmax.f32 %v591, 0.0
      %v622 = vmax.f32 %v594, 0.0
      %v623 = vmax.f32 %v597, 0.0
      %v624 = vmax.f32 %v600, 0.0
      %v625 = vmax.f32 %v603, 0.0
      %v626 = vmax.f32 %v606, 0.0
      %v627 = vld [vmem:[%s5] sm:$0xff]
      %v628 = vld [vmem:[%s5 + $0x8] sm:$0xff]
      %v629 = vld [vmem:[%s5 + $0x10] sm:$0xff]
      %v630 = vld [vmem:[%s5 + $0x18] sm:$0xff]
      %v631 = vld [vmem:[%s5 + $0x20] sm:$0xff]
      %v632 = vld [vmem:[%s5 + $0x28] sm:$0xff]
      %v633 = vld [vmem:[%s5 + $0x30] sm:$0xff]
      %v634 = vld [vmem:[%s5 + $0x38] sm:$0xff]
      %v635 = vld [vmem:[%s5 + $0x40] sm:$0xff]
      %v636 = vld [vmem:[%s5 + $0x48] sm:$0xff]
      %v637 = vld [vmem:[%s5 + $0x50] sm:$0xff]
      %v638 = vld [vmem:[%s5 + $0x58] sm:$0xff]
      %v639 = vld [vmem:[%s5 + $0x60] sm:$0xff]
      %v640 = vld [vmem:[%s5 + $0x68] sm:$0xff]
      %v641 = vld [vmem:[%s5 + $0x70] sm:$0xff]
      %v642 = vld [vmem:[%s5 + $0x78] sm:$0xff]
      %v643 = vld [vmem:[%s6] sm:$0x1]
      %v645 = vperm.slane %v643, 0
      %647 = vmatpush.msra.mxu0 %v642
      %648 = vmatpush.msra.mxu0 %v641
      %649 = vmatpush.msra.mxu0 %v640
      %650 = vmatpush.msra.mxu0 %v639
      %651 = vmatpush.msra.mxu0 %v638
      %652 = vmatpush.msra.mxu0 %v637
      %653 = vmatpush.msra.mxu0 %v636
      %654 = vmatpush.msra.mxu0 %v635
      %655 = vmatpush.msra.mxu0 %v634
      %656 = vmatpush.msra.mxu0 %v633
      %657 = vmatpush.msra.mxu0 %v632
      %658 = vmatpush.msra.mxu0 %v631
      %659 = vmatpush.msra.mxu0 %v630
      %660 = vmatpush.msra.mxu0 %v629
      %661 = vmatpush.msra.mxu0 %v628
      %662 = vmatpush.msra.mxu0 %v627
      %663 = vmatmul.f32.gmra.mxu0 %v608
      %v664 = vpop.f32.mrf.mxu0
      %v665 = vadd.f32 %v645, %v664
      %666 = vmatmul.f32.gmra.mxu0 %v609
      %v667 = vpop.f32.mrf.mxu0
      %v668 = vadd.f32 %v645, %v667
      %669 = vmatmul.f32.gmra.mxu0 %v610
      %v670 = vpop.f32.mrf.mxu0
      %v671 = vadd.f32 %v645, %v670
      %672 = vmatmul.f32.gmra.mxu0 %v611
      %v673 = vpop.f32.mrf.mxu0
      %v674 = vadd.f32 %v645, %v673
      %675 = vmatmul.f32.gmra.mxu0 %v612
      %v676 = vpop.f32.mrf.mxu0
      %v677 = vadd.f32 %v645, %v676
      %678 = vmatmul.f32.gmra.mxu0 %v613
      %v679 = vpop.f32.mrf.mxu0
      %v680 = vadd.f32 %v645, %v679
      %681 = vmatmul.f32.gmra.mxu0 %v614
      %v682 = vpop.f32.mrf.mxu0
      %v683 = vadd.f32 %v645, %v682
      %684 = vmatmul.f32.gmra.mxu0 %v615
      %v685 = vpop.f32.mrf.mxu0
      %v686 = vadd.f32 %v645, %v685
      %687 = vmatmul.f32.gmra.mxu0 %v616
      %v688 = vpop.f32.mrf.mxu0
      %v689 = vadd.f32 %v645, %v688
      %690 = vmatmul.f32.gmra.mxu0 %v617
      %v691 = vpop.f32.mrf.mxu0
      %v692 = vadd.f32 %v645, %v691
      %693 = vmatmul.f32.gmra.mxu0 %v618
      %v694 = vpop.f32.mrf.mxu0
      %v695 = vadd.f32 %v645, %v694
      %696 = vmatmul.f32.gmra.mxu0 %v619
      %v697 = vpop.f32.mrf.mxu0
      %v698 = vadd.f32 %v645, %v697
      %699 = vmatmul.f32.gmra.mxu0 %v620
      %v700 = vpop.f32.mrf.mxu0
      %v701 = vadd.f32 %v645, %v700
      %702 = vmatmul.f32.gmra.mxu0 %v621
      %v703 = vpop.f32.mrf.mxu0
      %v704 = vadd.f32 %v645, %v703
      %705 = vmatmul.f32.gmra.mxu0 %v622
      %v706 = vpop.f32.mrf.mxu0
      %v707 = vadd.f32 %v645, %v706
      %708 = vmatmul.f32.gmra.mxu0 %v623
      %v709 = vpop.f32.mrf.mxu0
      %v710 = vadd.f32 %v645, %v709
      %711 = vmatmul.f32.gmra.mxu0 %v624
      %v712 = vpop.f32.mrf.mxu0
      %v713 = vadd.f32 %v645, %v712
      %714 = vmatmul.f32.gmra.mxu0 %v625
      %v715 = vpop.f32.mrf.mxu0
      %v716 = vadd.f32 %v645, %v715
      %717 = vmatmul.f32.gmra.mxu0 %v626
      %v718 = vpop.f32.mrf.mxu0
      %v719 = vadd.f32 %v645, %v718
      %720 = vdwg.mxu0
      %v721 = vmax.f32 %v665, 0.0
      %v722 = vmax.f32 %v668, 0.0
      %v723 = vmax.f32 %v671, 0.0
      %v724 = vmax.f32 %v674, 0.0
      %v725 = vmax.f32 %v677, 0.0
      %v726 = vmax.f32 %v680, 0.0
      %v727 = vmax.f32 %v683, 0.0
      %v728 = vmax.f32 %v686, 0.0
      %v729 = vmax.f32 %v689, 0.0
      %v730 = vmax.f32 %v692, 0.0
      %v731 = vmax.f32 %v695, 0.0
      %v732 = vmax.f32 %v698, 0.0
      %v733 = vmax.f32 %v701, 0.0
      %v734 = vmax.f32 %v704, 0.0
      %v735 = vmax.f32 %v707, 0.0
      %v736 = vmax.f32 %v710, 0.0
      %v737 = vmax.f32 %v713, 0.0
      %v738 = vmax.f32 %v716, 0.0
      %v739 = vmax.f32 %v719, 0.0
      %v740 = vld [vmem:[%s7] sm:$0xff]
      %v741 = vld [vmem:[%s7 + $0x8] sm:$0xff]
      %v742 = vld [vmem:[%s7 + $0x10] sm:$0xff]
      %v743 = vld [vmem:[%s7 + $0x18] sm:$0xff]
      %v744 = vld [vmem:[%s7 + $0x20] sm:$0xff]
      %v745 = vld [vmem:[%s7 + $0x28] sm:$0xff]
      %v746 = vld [vmem:[%s7 + $0x30] sm:$0xff]
      %v747 = vld [vmem:[%s7 + $0x38] sm:$0xff]
      %v748 = vld [vmem:[%s7 + $0x40] sm:$0xff]
      %v749 = vld [vmem:[%s7 + $0x48] sm:$0xff]
      %v750 = vld [vmem:[%s7 + $0x50] sm:$0xff]
      %v751 = vld [vmem:[%s7 + $0x58] sm:$0xff]
      %v752 = vld [vmem:[%s7 + $0x60] sm:$0xff]
      %v753 = vld [vmem:[%s7 + $0x68] sm:$0xff]
      %v754 = vld [vmem:[%s7 + $0x70] sm:$0xff]
      %v755 = vld [vmem:[%s7 + $0x78] sm:$0xff]
      %v756 = vld [vmem:[%s8] sm:$0x1]
      %v758 = vperm.slane %v756, 0
      %760 = vmatpush.msra.mxu0 %v755
      %761 = vmatpush.msra.mxu0 %v754
      %762 = vmatpush.msra.mxu0 %v753
      %763 = vmatpush.msra.mxu0 %v752
      %764 = vmatpush.msra.mxu0 %v751
      %765 = vmatpush.msra.mxu0 %v750
      %766 = vmatpush.msra.mxu0 %v749
      %767 = vmatpush.msra.mxu0 %v748
      %768 = vmatpush.msra.mxu0 %v747
      %769 = vmatpush.msra.mxu0 %v746
      %770 = vmatpush.msra.mxu0 %v745
      %771 = vmatpush.msra.mxu0 %v744
      %772 = vmatpush.msra.mxu0 %v743
      %773 = vmatpush.msra.mxu0 %v742
      %774 = vmatpush.msra.mxu0 %v741
      %775 = vmatpush.msra.mxu0 %v740
      %776 = vmatmul.f32.gmra.mxu0 %v721
      %v777 = vpop.f32.mrf.mxu0
      %v778 = vadd.f32 %v758, %v777
      %779 = vmatmul.f32.gmra.mxu0 %v722
      %v780 = vpop.f32.mrf.mxu0
      %v781 = vadd.f32 %v758, %v780
      %782 = vmatmul.f32.gmra.mxu0 %v723
      %v783 = vpop.f32.mrf.mxu0
      %v784 = vadd.f32 %v758, %v783
      %785 = vmatmul.f32.gmra.mxu0 %v724
      %v786 = vpop.f32.mrf.mxu0
      %v787 = vadd.f32 %v758, %v786
      %788 = vmatmul.f32.gmra.mxu0 %v725
      %v789 = vpop.f32.mrf.mxu0
      %v790 = vadd.f32 %v758, %v789
      %791 = vmatmul.f32.gmra.mxu0 %v726
      %v792 = vpop.f32.mrf.mxu0
      %v793 = vadd.f32 %v758, %v792
      %794 = vmatmul.f32.gmra.mxu0 %v727
      %v795 = vpop.f32.mrf.mxu0
      %v796 = vadd.f32 %v758, %v795
      %797 = vmatmul.f32.gmra.mxu0 %v728
      %v798 = vpop.f32.mrf.mxu0
      %v799 = vadd.f32 %v758, %v798
      %800 = vmatmul.f32.gmra.mxu0 %v729
      %v801 = vpop.f32.mrf.mxu0
      %v802 = vadd.f32 %v758, %v801
      %803 = vmatmul.f32.gmra.mxu0 %v730
      %v804 = vpop.f32.mrf.mxu0
      %v805 = vadd.f32 %v758, %v804
      %806 = vmatmul.f32.gmra.mxu0 %v731
      %v807 = vpop.f32.mrf.mxu0
      %v808 = vadd.f32 %v758, %v807
      %809 = vmatmul.f32.gmra.mxu0 %v732
      %v810 = vpop.f32.mrf.mxu0
      %v811 = vadd.f32 %v758, %v810
      %812 = vmatmul.f32.gmra.mxu0 %v733
      %v813 = vpop.f32.mrf.mxu0
      %v814 = vadd.f32 %v758, %v813
      %815 = vmatmul.f32.gmra.mxu0 %v734
      %v816 = vpop.f32.mrf.mxu0
      %v817 = vadd.f32 %v758, %v816
      %818 = vmatmul.f32.gmra.mxu0 %v735
      %v819 = vpop.f32.mrf.mxu0
      %v820 = vadd.f32 %v758, %v819
      %821 = vmatmul.f32.gmra.mxu0 %v736
      %v822 = vpop.f32.mrf.mxu0
      %v823 = vadd.f32 %v758, %v822
      %824 = vmatmul.f32.gmra.mxu0 %v737
      %v825 = vpop.f32.mrf.mxu0
      %v826 = vadd.f32 %v758, %v825
      %827 = vmatmul.f32.gmra.mxu0 %v738
      %v828 = vpop.f32.mrf.mxu0
      %v829 = vadd.f32 %v758, %v828
      %830 = vmatmul.f32.gmra.mxu0 %v739
      %v831 = vpop.f32.mrf.mxu0
      %v832 = vadd.f32 %v758, %v831
      %833 = vdwg.mxu0
      %vm834 = vcmask 130048
      %835 = vst.msk [vmem:[%s334] sm:$0xff] %vm834, %v778
      %836 = vst.msk [vmem:[%s334 + $0x8] sm:$0xff] %vm834, %v781
      %837 = vst.msk [vmem:[%s334 + $0x10] sm:$0xff] %vm834, %v784
      %838 = vst.msk [vmem:[%s334 + $0x18] sm:$0xff] %vm834, %v787
      %839 = vst.msk [vmem:[%s334 + $0x20] sm:$0xff] %vm834, %v790
      %840 = vst.msk [vmem:[%s334 + $0x28] sm:$0xff] %vm834, %v793
      %841 = vst.msk [vmem:[%s334 + $0x30] sm:$0xff] %vm834, %v796
      %842 = vst.msk [vmem:[%s334 + $0x38] sm:$0xff] %vm834, %v799
      %843 = vst.msk [vmem:[%s334 + $0x40] sm:$0xff] %vm834, %v802
      %844 = vst.msk [vmem:[%s334 + $0x48] sm:$0xff] %vm834, %v805
      %845 = vst.msk [vmem:[%s334 + $0x50] sm:$0xff] %vm834, %v808
      %846 = vst.msk [vmem:[%s334 + $0x58] sm:$0xff] %vm834, %v811
      %847 = vst.msk [vmem:[%s334 + $0x60] sm:$0xff] %vm834, %v814
      %848 = vst.msk [vmem:[%s334 + $0x68] sm:$0xff] %vm834, %v817
      %849 = vst.msk [vmem:[%s334 + $0x70] sm:$0xff] %vm834, %v820
      %850 = vst.msk [vmem:[%s334 + $0x78] sm:$0xff] %vm834, %v823
      %851 = vst.msk [vmem:[%s334 + $0x80] sm:$0xff] %vm834, %v826
      %852 = vst.msk [vmem:[%s334 + $0x88] sm:$0xff] %vm834, %v829
      %853 = vst.msk [vmem:[%s334 + $0x90] sm:$0xff] %vm834, %v832
      %s854 = smul.u32 19, %s20
      %p855 = scmp.lt.s32.totalorder %s854, 37
      %s856 = scalar_select %p855, %s854, 37
      %s857 = smul.addr %s856, 8
      %s858 = scalar_lea.vmem %s9, %s857
      // Predicated region
      $region57: #{tpu_custom_call.1} parent=55 // pred_check
        %p859 = pneg %p232
      $region58: #{tpu_custom_call.1} parent=55 // pred_check_branch
        %861 = sbr.rel (%p859) target = $region60
      $region59: #{tpu_custom_call.1} parent=55 // pred_region
        %s862 = smul.u32 19, %s20
      $region60: #{tpu_custom_call.1} parent=55 // pred_fallthru
        _
    $region56: #{tpu_custom_call.1} parent=5 // pred_fallthru
      _
    %p863 = scmp.le.s32.totalorder 2, %s15
    // Predicated region
    $region61: #{tpu_custom_call.1} parent=5 // pred_check
      %p864 = pneg %p863
    $region62: #{tpu_custom_call.1} parent=5 // pred_check_branch
      %866 = sbr.rel (%p864) target = $region64
    $region63: #{tpu_custom_call.1} parent=5 // pred_region
      %s867 = ssub.s32 %s15, 2
      // Predicated region
      $region65: #{tpu_custom_call.1} parent=63 // pred_check
        %p868 = pneg %p238
      $region66: #{tpu_custom_call.1} parent=63 // pred_check_branch
        %870 = sbr.rel (%p868) target = $region68
      $region67: #{tpu_custom_call.1} parent=63 // pred_region
        %s871 = smul.u32 19, %s21
        %p872 = scmp.lt.s32.totalorder %s871, 37
        %s873 = scalar_select %p872, %s871, 37
        %s874 = smul.addr %s873, 8
        %s875 = scalar_lea.vmem %s9, %s874
      $region68: #{tpu_custom_call.1} parent=63 // pred_fallthru
        _
    $region64: #{tpu_custom_call.1} parent=5 // pred_fallthru
      _
  $region6: #{tpu_custom_call.1} parent=0 // loop_footer
    %s19 = sadd.s32 1, %s15
  $region7: #{tpu_custom_call.1} parent=0 // loop_footer_branch
    %14 = sbr.rel target = $region3
  $region8: #{tpu_custom_call.1} parent=0 // loop_exit
    _

</llo_original>
